<compile_context>
chip_gen: v5e
topology: v5e:2x2
jax: 0.10.0
libtpu: 0.0.40
codegen_flags: <defaults>
</compile_context>

<pallas_src>
import functools

import jax
import jax.numpy as jnp
from jax.experimental import pallas as pl
from jax.experimental.pallas import tpu as pltpu

LANES = 128
_SUBLANE_MULT = 32   # int8 label tile rule (32,128); also covers bf16 (16) and f32 (8)


def _bce_dice_kernel(logits_ref, labels_ref, w_ref,
                     inter_ref, psum_ref, gsum_ref, ce_num_ref, ce_den_ref,
                     *, n_classes, ce_ignore, dice_ignore, use_softmax):
    # Zero this (batch, core-split) block's resident accumulators on the first row-tile.
    @pl.when(pl.program_id(2) == 0)
    def _init():
        inter_ref[...] = jnp.zeros_like(inter_ref)
        psum_ref[...] = jnp.zeros_like(psum_ref)
        gsum_ref[...] = jnp.zeros_like(gsum_ref)
        ce_num_ref[...] = jnp.zeros_like(ce_num_ref)
        ce_den_ref[...] = jnp.zeros_like(ce_den_ref)

    x = logits_ref[...].astype(jnp.float32)      # (C, TM, 128)  bf16/f32 -> f32 in-VMEM
    lbl = labels_ref[...].astype(jnp.int32)      # (TM, 128)     int8 -> int32

    # Validity masks.  Padded pixels carry label -1 and are excluded everywhere.
    valid_pad = lbl >= 0
    valid_ce = jnp.logical_and(valid_pad, lbl != ce_ignore).astype(jnp.float32)
    if dice_ignore == ce_ignore:
        valid_d = valid_ce
    else:
        valid_d = jnp.logical_and(valid_pad, lbl != dice_ignore).astype(jnp.float32)

    # Per-pixel class weight from SMEM scalar splats (no (C,1,1) VMEM broadcast).
    w_pix = jnp.zeros(lbl.shape, jnp.float32)
    for c in range(n_classes):
        w_pix = jnp.where(lbl == c, w_ref[c], w_pix)

    # One-hot of the target class over the leading class axis.
    cls = jax.lax.broadcasted_iota(jnp.int32, x.shape, 0)       # (C, TM, 128)
    onehot = (cls == lbl[None]).astype(jnp.float32)

    # ---- softmax pieces over the class (leading) axis: elementwise over C slabs ----
    m = jnp.max(x, axis=0)                        # (TM, 128)
    e = jnp.exp(x - m[None])                      # (C, TM, 128); shifted slab only feeds exp
    se = jnp.sum(e, axis=0)                       # (TM, 128)

    # ---- weighted cross-entropy, torch reduction='mean' semantics with ignore_index ----
    # nll = log(sum exp x) - x[target] = m + log(sum exp(x - m)) - x[target]
    x_tgt = jnp.sum(onehot * x, axis=0)           # (TM, 128)
    ce_w = w_pix * valid_ce
    ce_num_ref[...] += jnp.sum((m + jnp.log(se) - x_tgt) * ce_w, axis=0, keepdims=True)
    ce_den_ref[...] += jnp.sum(ce_w, axis=0, keepdims=True)

    # ---- soft Dice statistics (ignore_index masked out) ----
    if use_softmax:
        probs = e * pl.reciprocal(se, approx=True)[None]
    else:
        # sigmoid via EUP exp + approx reciprocal (keeps the divide off the VALU slot)
        probs = pl.reciprocal(1.0 + jnp.exp(-x), approx=True)
    tgt = onehot * valid_d[None]                  # (C, TM, 128)
    pm = probs * valid_d[None]                    # (C, TM, 128)
    inter_ref[...] += jnp.sum(probs * tgt, axis=1)    # (C, 128)
    psum_ref[...] += jnp.sum(pm, axis=1)              # (C, 128)
    gsum_ref[...] += jnp.sum(tgt, axis=1)             # (C, 128)


def _choose_tile_rows(rows, target):
    """Pick (padded_rows, TM): TM divides padded_rows; TM multiple of 32 when tiling."""
    if rows <= target:
        return rows, rows                         # single full-extent tile (any size is legal)
    tm = max(_SUBLANE_MULT, (target // _SUBLANE_MULT) * _SUBLANE_MULT)
    padded = pl.cdiv(rows, tm) * tm
    n_tiles = padded // tm
    # Pad one extra tile when cheap so the tile count is even and the v7x core split engages.
    if n_tiles % 2 == 1 and n_tiles >= 8:
        padded += tm
    return padded, tm


def bce_and_dice_loss(preds, labels, class_weights, *,
                      ce_ignore_index=-100, dice_ignore_index=2,
                      use_softmax=False, smooth=1.0, target_rows=None):
    """preds: (B, C, H, W) logits (f32 or, preferably, bf16).  labels: (B, H, W) int ids.

    Class ids / ignore indices must fit in int8 and differ from the -1 padding sentinel.
    """
    B, C, H, W = preds.shape
    HW = H * W
    rows0 = pl.cdiv(HW, LANES)

    # VMEM-budget-derived tile rows: bf16 input x2 buffers + ~4 live f32 class slabs + row temps.
    if target_rows is None:
        budget = 40 * 1024 * 1024
        per_row = LANES * (20 * C + 36)
        target_rows = max(_SUBLANE_MULT, min(1024, budget // per_row))

    R, TM = _choose_tile_rows(rows0, int(target_rows))
    pad = R * LANES - HW

    x = preds.reshape(B, C, HW)                      # keep native dtype (bf16 recommended)
    lbl = labels.reshape(B, HW).astype(jnp.int8)     # class ids + sentinels fit in int8
    if pad:
        x = jnp.pad(x, ((0, 0), (0, 0), (0, pad)))
        lbl = jnp.pad(lbl, ((0, 0), (0, pad)), constant_values=-1)   # -1 = padding sentinel
    x = x.reshape(B, C, R, LANES)
    lbl = lbl.reshape(B, R, LANES)
    w = jnp.asarray(class_weights, jnp.float32).reshape(C)

    n_tiles = R // TM
    n_split = 2 if (n_tiles % 2 == 0 and n_tiles >= 2) else 1   # v7x: 2nd parallel axis
    tps = n_tiles // n_split

    kernel = functools.partial(
        _bce_dice_kernel,
        n_classes=C,
        ce_ignore=int(ce_ignore_index),
        dice_ignore=int(dice_ignore_index),
        use_softmax=use_softmax,
    )

    acc_c = pl.BlockSpec((None, None, C, LANES), lambda b, s, i: (b, s, 0, 0))
    acc_1 = pl.BlockSpec((None, None, 1, LANES), lambda b, s, i: (b, s, 0, 0))

    outs = pl.pallas_call(
        kernel,
        out_shape=(
            jax.ShapeDtypeStruct((B, n_split, C, LANES), jnp.float32),  # dice intersection
            jax.ShapeDtypeStruct((B, n_split, C, LANES), jnp.float32),  # dice prob-sum
            jax.ShapeDtypeStruct((B, n_split, C, LANES), jnp.float32),  # dice target-sum
            jax.ShapeDtypeStruct((B, n_split, 1, LANES), jnp.float32),  # CE weighted-NLL
            jax.ShapeDtypeStruct((B, n_split, 1, LANES), jnp.float32),  # CE weight sum
        ),
        grid_spec=pltpu.PrefetchScalarGridSpec(
            num_scalar_prefetch=0,
            grid=(B, n_split, tps),
            in_specs=[
                pl.BlockSpec((None, C, TM, LANES),
                             lambda b, s, i: (b, 0, s * tps + i, 0)),      # logits tile
                pl.BlockSpec((None, TM, LANES),
                             lambda b, s, i: (b, s * tps + i, 0)),         # labels tile
                pl.BlockSpec(memory_space=pltpu.MemorySpace.SMEM),         # class weights
            ],
            out_specs=[acc_c, acc_c, acc_c, acc_1, acc_1],
        ),
        compiler_params=pltpu.CompilerParams(
            dimension_semantics=("parallel", "parallel", "arbitrary"),
            vmem_limit_bytes=48 * 1024 * 1024,
        ),
    )(x, lbl, w)

    inter_p, psum_p, gsum_p, ce_num_p, ce_den_p = outs

    # Tiny epilogue: fold batch/core-split blocks + 128 lanes, then combine the losses.
    inter = inter_p.sum(axis=(0, 1, 3))
    psum = psum_p.sum(axis=(0, 1, 3))
    gsum = gsum_p.sum(axis=(0, 1, 3))
    dice = (2.0 * inter + smooth) / (psum + gsum + smooth)
    dice_loss = 1.0 - dice.mean()
    # NOTE: matches torch semantics — if every pixel is ignored, ce_den == 0 -> NaN.
    ce_loss = ce_num_p.sum() / ce_den_p.sum()
    return dice_loss + ce_loss


def _reference(preds, labels, w, ce_ignore, dice_ignore, use_softmax, smooth=1.0):
    """Pure-JAX reference with identical semantics (for the correctness check)."""
    B, C, H, W = preds.shape
    x = preds.astype(jnp.float32).transpose(1, 0, 2, 3).reshape(C, -1)
    y = labels.reshape(-1)
    onehot = jax.nn.one_hot(y, C, axis=0, dtype=jnp.float32)
    logp = jax.nn.log_softmax(x, axis=0)
    valid_ce = (y != ce_ignore).astype(jnp.float32)
    w_pix = w[jnp.clip(y, 0, C - 1)]
    nll = -jnp.sum(onehot * logp, axis=0)
    ce = jnp.sum(nll * w_pix * valid_ce) / jnp.sum(w_pix * valid_ce)
    probs = jax.nn.softmax(x, axis=0) if use_softmax else jax.nn.sigmoid(x)
    valid_d = (y != dice_ignore).astype(jnp.float32)
    tgt = onehot * valid_d
    pm = probs * valid_d
    inter = jnp.sum(pm * tgt, axis=1)
    dice = (2.0 * inter + smooth) / (jnp.sum(pm, axis=1) + jnp.sum(tgt, axis=1) + smooth)
    return (1.0 - dice.mean()) + ce


if __name__ == "__main__":
    key = jax.random.PRNGKey(0)
    k1, k2, k3, k4 = jax.random.split(key, 4)

    # Test 1: module defaults (sigmoid dice), bf16 logits, single-tile path.
    B, C, H, W = 2, 3, 16, 16
    preds = jax.random.normal(k1, (B, C, H, W), dtype=jnp.float32).astype(jnp.bfloat16)
    labels = jax.random.randint(k2, (B, H, W), 0, C, dtype=jnp.int32)
    class_weights = jnp.array([1.0, 2.0, 0.5], dtype=jnp.float32)

    loss = jax.block_until_ready(bce_and_dice_loss(
        preds, labels, class_weights,
        ce_ignore_index=2,       # BCEandDiceLoss(ignore_index=2, ...)
        dice_ignore_index=2,     # DiceLoss(ignore_index=2) hard-coded in the module
        use_softmax=False))      # module default
    ref = jax.block_until_ready(_reference(
        preds, labels, class_weights, ce_ignore=2, dice_ignore=2, use_softmax=False))
    assert loss.shape == () and jnp.isfinite(loss)
    # tolerance covers the EUP approximate reciprocal + accumulation-order differences
    assert abs(float(loss) - float(ref)) <= 2e-3 * max(1.0, abs(float(ref))), (loss, ref)

    # Test 2: softmax dice, f32 logits, padding + multi-tile accumulation + core-split path.
    B2, C2, H2, W2 = 1, 4, 120, 120
    preds2 = jax.random.normal(k3, (B2, C2, H2, W2), dtype=jnp.float32)
    labels2 = jax.random.randint(k4, (B2, H2, W2), 0, C2, dtype=jnp.int32)
    class_weights2 = jnp.array([0.5, 1.0, 1.5, 2.0], dtype=jnp.float32)

    loss2 = jax.block_until_ready(bce_and_dice_loss(
        preds2, labels2, class_weights2,
        ce_ignore_index=-100, dice_ignore_index=2,
        use_softmax=True, target_rows=32))
    ref2 = jax.block_until_ready(_reference(
        preds2, labels2, class_weights2, ce_ignore=-100, dice_ignore=2, use_softmax=True))
    assert loss2.shape == () and jnp.isfinite(loss2)
    assert abs(float(loss2) - float(ref2)) <= 2e-3 * max(1.0, abs(float(ref2))), (loss2, ref2)

    print("KERNEL_OK")
</pallas_src>

<mosaic_0001>
module attributes {stable_mosaic.version = 11 : i64} {
  func.func @_bce_dice_kernel(%arg0: i32, %arg1: i32, %arg2: i32, %arg3: memref<1x3x2x128xbf16, #tpu.memory_space<vmem>>, %arg4: memref<1x2x128xi8, #tpu.memory_space<vmem>>, %arg5: memref<3xf32, #tpu.memory_space<smem>>, %arg6: memref<1x1x3x128xf32, #tpu.memory_space<vmem>>, %arg7: memref<1x1x3x128xf32, #tpu.memory_space<vmem>>, %arg8: memref<1x1x3x128xf32, #tpu.memory_space<vmem>>, %arg9: memref<1x1x1x128xf32, #tpu.memory_space<vmem>>, %arg10: memref<1x1x1x128xf32, #tpu.memory_space<vmem>>) attributes {dimension_semantics = [#tpu.dimension_semantics<parallel>, #tpu.dimension_semantics<parallel>, #tpu.dimension_semantics<arbitrary>], iteration_bounds = array<i64: 2, 1, 1>, scalar_prefetch = 0 : i64, scratch_operands = 0 : i64, tpu.core_type = #tpu.core_type<tc>, window_params = [{transform_indices = @transform_0, window_bounds = array<i64: 1, 3, 2, 128>}, {transform_indices = @transform_1, window_bounds = array<i64: 1, 2, 128>}, {transform_indices = @transform_2, window_bounds = array<i64: 3>}, {transform_indices = @transform_3, window_bounds = array<i64: 1, 1, 3, 128>}, {transform_indices = @transform_4, window_bounds = array<i64: 1, 1, 3, 128>}, {transform_indices = @transform_5, window_bounds = array<i64: 1, 1, 3, 128>}, {transform_indices = @transform_6, window_bounds = array<i64: 1, 1, 1, 128>}, {transform_indices = @transform_7, window_bounds = array<i64: 1, 1, 1, 128>}]} {
    %c0_i32 = arith.constant 0 : i32
    %0 = arith.cmpi eq, %arg2, %c0_i32 : i32
    %1 = arith.extui %0 : i1 to i32
    %c0_i32_0 = arith.constant 0 : i32
    %2 = arith.cmpi ne, %1, %c0_i32_0 : i32
    scf.if %2 {
      %cst_61 = arith.constant 0.000000e+00 : f32
      %101 = vector.broadcast %cst_61 : f32 to vector<3x128xf32>
      %c0_62 = arith.constant 0 : index
      %c0_63 = arith.constant 0 : index
      %c0_64 = arith.constant 0 : index
      %c0_65 = arith.constant 0 : index
      %102 = vector.load %arg6[%c0_62, %c0_63, %c0_64, %c0_65] : memref<1x1x3x128xf32, #tpu.memory_space<vmem>>, vector<1x1x3x128xf32>
      %103 = vector.shape_cast %102 : vector<1x1x3x128xf32> to vector<3x128xf32>
      %104 = vector.shape_cast %101 : vector<3x128xf32> to vector<1x1x3x128xf32>
      tpu.vector_store %arg6[%c0_62, %c0_63, %c0_64, %c0_65], %104 {strides = array<i32>} : memref<1x1x3x128xf32, #tpu.memory_space<vmem>>, vector<1x1x3x128xf32>,
      %cst_66 = arith.constant 0.000000e+00 : f32
      %105 = vector.broadcast %cst_66 : f32 to vector<3x128xf32>
      %c0_67 = arith.constant 0 : index
      %c0_68 = arith.constant 0 : index
      %c0_69 = arith.constant 0 : index
      %c0_70 = arith.constant 0 : index
      %106 = vector.load %arg7[%c0_67, %c0_68, %c0_69, %c0_70] : memref<1x1x3x128xf32, #tpu.memory_space<vmem>>, vector<1x1x3x128xf32>
      %107 = vector.shape_cast %106 : vector<1x1x3x128xf32> to vector<3x128xf32>
      %108 = vector.shape_cast %105 : vector<3x128xf32> to vector<1x1x3x128xf32>
      tpu.vector_store %arg7[%c0_67, %c0_68, %c0_69, %c0_70], %108 {strides = array<i32>} : memref<1x1x3x128xf32, #tpu.memory_space<vmem>>, vector<1x1x3x128xf32>,
      %cst_71 = arith.constant 0.000000e+00 : f32
      %109 = vector.broadcast %cst_71 : f32 to vector<3x128xf32>
      %c0_72 = arith.constant 0 : index
      %c0_73 = arith.constant 0 : index
      %c0_74 = arith.constant 0 : index
      %c0_75 = arith.constant 0 : index
      %110 = vector.load %arg8[%c0_72, %c0_73, %c0_74, %c0_75] : memref<1x1x3x128xf32, #tpu.memory_space<vmem>>, vector<1x1x3x128xf32>
      %111 = vector.shape_cast %110 : vector<1x1x3x128xf32> to vector<3x128xf32>
      %112 = vector.shape_cast %109 : vector<3x128xf32> to vector<1x1x3x128xf32>
      tpu.vector_store %arg8[%c0_72, %c0_73, %c0_74, %c0_75], %112 {strides = array<i32>} : memref<1x1x3x128xf32, #tpu.memory_space<vmem>>, vector<1x1x3x128xf32>,
      %cst_76 = arith.constant 0.000000e+00 : f32
      %113 = vector.broadcast %cst_76 : f32 to vector<1x128xf32>
      %c0_77 = arith.constant 0 : index
      %c0_78 = arith.constant 0 : index
      %c0_79 = arith.constant 0 : index
      %c0_80 = arith.constant 0 : index
      %114 = vector.load %arg9[%c0_77, %c0_78, %c0_79, %c0_80] : memref<1x1x1x128xf32, #tpu.memory_space<vmem>>, vector<1x1x1x128xf32>
      %115 = vector.shape_cast %114 : vector<1x1x1x128xf32> to vector<1x128xf32>
      %116 = vector.shape_cast %113 : vector<1x128xf32> to vector<1x1x1x128xf32>
      tpu.vector_store %arg9[%c0_77, %c0_78, %c0_79, %c0_80], %116 {strides = array<i32>} : memref<1x1x1x128xf32, #tpu.memory_space<vmem>>, vector<1x1x1x128xf32>,
      %cst_81 = arith.constant 0.000000e+00 : f32
      %117 = vector.broadcast %cst_81 : f32 to vector<1x128xf32>
      %c0_82 = arith.constant 0 : index
      %c0_83 = arith.constant 0 : index
      %c0_84 = arith.constant 0 : index
      %c0_85 = arith.constant 0 : index
      %118 = vector.load %arg10[%c0_82, %c0_83, %c0_84, %c0_85] : memref<1x1x1x128xf32, #tpu.memory_space<vmem>>, vector<1x1x1x128xf32>
      %119 = vector.shape_cast %118 : vector<1x1x1x128xf32> to vector<1x128xf32>
      %120 = vector.shape_cast %117 : vector<1x128xf32> to vector<1x1x1x128xf32>
      tpu.vector_store %arg10[%c0_82, %c0_83, %c0_84, %c0_85], %120 {strides = array<i32>} : memref<1x1x1x128xf32, #tpu.memory_space<vmem>>, vector<1x1x1x128xf32>,
    } else {
    }
    %c0 = arith.constant 0 : index
    %c0_1 = arith.constant 0 : index
    %c0_2 = arith.constant 0 : index
    %c0_3 = arith.constant 0 : index
    %3 = vector.load %arg3[%c0, %c0_1, %c0_2, %c0_3] : memref<1x3x2x128xbf16, #tpu.memory_space<vmem>>, vector<1x3x2x128xbf16>
    %4 = vector.shape_cast %3 : vector<1x3x2x128xbf16> to vector<3x2x128xbf16>
    %5 = arith.extf %4 : vector<3x2x128xbf16> to vector<3x2x128xf32>
    %c0_4 = arith.constant 0 : index
    %c0_5 = arith.constant 0 : index
    %c0_6 = arith.constant 0 : index
    %6 = vector.load %arg4[%c0_4, %c0_5, %c0_6] : memref<1x2x128xi8, #tpu.memory_space<vmem>>, vector<1x2x128xi8>
    %7 = vector.shape_cast %6 : vector<1x2x128xi8> to vector<2x128xi8>
    %8 = arith.extsi %7 : vector<2x128xi8> to vector<2x128xi32>
    %c0_i32_7 = arith.constant 0 : i32
    %9 = vector.broadcast %c0_i32_7 : i32 to vector<2x128xi32>
    %10 = arith.cmpi sge, %8, %9 : vector<2x128xi32>
    %c2_i32 = arith.constant 2 : i32
    %11 = vector.broadcast %c2_i32 : i32 to vector<2x128xi32>
    %12 = arith.cmpi ne, %8, %11 : vector<2x128xi32>
    %13 = arith.andi %10, %12 : vector<2x128xi1>
    %14 = arith.extui %13 : vector<2x128xi1> to vector<2x128xi32>
    %15 = arith.sitofp %14 : vector<2x128xi32> to vector<2x128xf32>
    %cst = arith.constant 0.000000e+00 : f32
    %16 = vector.broadcast %cst : f32 to vector<2x128xf32>
    %c0_i32_8 = arith.constant 0 : i32
    %17 = vector.broadcast %c0_i32_8 : i32 to vector<2x128xi32>
    %18 = arith.cmpi eq, %8, %17 : vector<2x128xi32>
    %c0_9 = arith.constant 0 : index
    %19 = memref.load %arg5[%c0_9] : memref<3xf32, #tpu.memory_space<smem>>
    %20 = vector.broadcast %19 : f32 to vector<2x128xf32>
    %21 = arith.select %18, %20, %16 : vector<2x128xi1>, vector<2x128xf32>
    %c1_i32 = arith.constant 1 : i32
    %22 = vector.broadcast %c1_i32 : i32 to vector<2x128xi32>
    %23 = arith.cmpi eq, %8, %22 : vector<2x128xi32>
    %c1 = arith.constant 1 : index
    %24 = memref.load %arg5[%c1] : memref<3xf32, #tpu.memory_space<smem>>
    %25 = vector.broadcast %24 : f32 to vector<2x128xf32>
    %26 = arith.select %23, %25, %21 : vector<2x128xi1>, vector<2x128xf32>
    %c2_i32_10 = arith.constant 2 : i32
    %27 = vector.broadcast %c2_i32_10 : i32 to vector<2x128xi32>
    %28 = arith.cmpi eq, %8, %27 : vector<2x128xi32>
    %c2 = arith.constant 2 : index
    %29 = memref.load %arg5[%c2] : memref<3xf32, #tpu.memory_space<smem>>
    %30 = vector.broadcast %29 : f32 to vector<2x128xf32>
    %31 = arith.select %28, %30, %26 : vector<2x128xi1>, vector<2x128xf32>
    %32 = tpu.iota {dimensions = array<i32: 0>} : vector<3x2x128xi32>
    %33 = vector.shape_cast %8 : vector<2x128xi32> to vector<1x2x128xi32>
    %34 = vector.broadcast %33 : vector<1x2x128xi32> to vector<3x2x128xi32>
    %35 = arith.cmpi eq, %32, %34 : vector<3x2x128xi32>
    %36 = arith.extui %35 : vector<3x2x128xi1> to vector<3x2x128xi32>
    %37 = arith.sitofp %36 : vector<3x2x128xi32> to vector<3x2x128xf32>
    %cst_11 = arith.constant dense<0xFF800000> : vector<2x128xf32>
    %38 = vector.multi_reduction <maximumf>, %5, %cst_11 [0] : vector<3x2x128xf32> to vector<2x128xf32>
    %39 = vector.shape_cast %38 : vector<2x128xf32> to vector<1x2x128xf32>
    %40 = vector.broadcast %39 : vector<1x2x128xf32> to vector<3x2x128xf32>
    %41 = arith.subf %5, %40 : vector<3x2x128xf32>
    %42 = math.exp %41 : vector<3x2x128xf32>
    %cst_12 = arith.constant dense<0.000000e+00> : vector<2x128xf32>
    %43 = vector.multi_reduction <add>, %42, %cst_12 [0] : vector<3x2x128xf32> to vector<2x128xf32>
    %44 = arith.mulf %37, %5 : vector<3x2x128xf32>
    %cst_13 = arith.constant dense<0.000000e+00> : vector<2x128xf32>
    %45 = vector.multi_reduction <add>, %44, %cst_13 [0] : vector<3x2x128xf32> to vector<2x128xf32>
    %46 = arith.mulf %31, %15 : vector<2x128xf32>
    %c0_14 = arith.constant 0 : index
    %c0_15 = arith.constant 0 : index
    %c0_16 = arith.constant 0 : index
    %c0_17 = arith.constant 0 : index
    %47 = vector.load %arg9[%c0_14, %c0_15, %c0_16, %c0_17] : memref<1x1x1x128xf32, #tpu.memory_space<vmem>>, vector<1x1x1x128xf32>
    %48 = vector.shape_cast %47 : vector<1x1x1x128xf32> to vector<1x128xf32>
    %49 = math.log %43 : vector<2x128xf32>
    %50 = arith.addf %38, %49 : vector<2x128xf32>
    %51 = arith.subf %50, %45 : vector<2x128xf32>
    %52 = arith.mulf %51, %46 : vector<2x128xf32>
    %cst_18 = arith.constant dense<0.000000e+00> : vector<128xf32>
    %53 = vector.multi_reduction <add>, %52, %cst_18 [0] : vector<2x128xf32> to vector<128xf32>
    %54 = vector.shape_cast %53 : vector<128xf32> to vector<1x128xf32>
    %55 = arith.addf %48, %54 : vector<1x128xf32>
    %c0_19 = arith.constant 0 : index
    %c0_20 = arith.constant 0 : index
    %c0_21 = arith.constant 0 : index
    %c0_22 = arith.constant 0 : index
    %56 = vector.load %arg9[%c0_19, %c0_20, %c0_21, %c0_22] : memref<1x1x1x128xf32, #tpu.memory_space<vmem>>, vector<1x1x1x128xf32>
    %57 = vector.shape_cast %56 : vector<1x1x1x128xf32> to vector<1x128xf32>
    %58 = vector.shape_cast %55 : vector<1x128xf32> to vector<1x1x1x128xf32>
    tpu.vector_store %arg9[%c0_19, %c0_20, %c0_21, %c0_22], %58 {strides = array<i32>} : memref<1x1x1x128xf32, #tpu.memory_space<vmem>>, vector<1x1x1x128xf32>,
    %c0_23 = arith.constant 0 : index
    %c0_24 = arith.constant 0 : index
    %c0_25 = arith.constant 0 : index
    %c0_26 = arith.constant 0 : index
    %59 = vector.load %arg10[%c0_23, %c0_24, %c0_25, %c0_26] : memref<1x1x1x128xf32, #tpu.memory_space<vmem>>, vector<1x1x1x128xf32>
    %60 = vector.shape_cast %59 : vector<1x1x1x128xf32> to vector<1x128xf32>
    %cst_27 = arith.constant dense<0.000000e+00> : vector<128xf32>
    %61 = vector.multi_reduction <add>, %46, %cst_27 [0] : vector<2x128xf32> to vector<128xf32>
    %62 = vector.shape_cast %61 : vector<128xf32> to vector<1x128xf32>
    %63 = arith.addf %60, %62 : vector<1x128xf32>
    %c0_28 = arith.constant 0 : index
    %c0_29 = arith.constant 0 : index
    %c0_30 = arith.constant 0 : index
    %c0_31 = arith.constant 0 : index
    %64 = vector.load %arg10[%c0_28, %c0_29, %c0_30, %c0_31] : memref<1x1x1x128xf32, #tpu.memory_space<vmem>>, vector<1x1x1x128xf32>
    %65 = vector.shape_cast %64 : vector<1x1x1x128xf32> to vector<1x128xf32>
    %66 = vector.shape_cast %63 : vector<1x128xf32> to vector<1x1x1x128xf32>
    tpu.vector_store %arg10[%c0_28, %c0_29, %c0_30, %c0_31], %66 {strides = array<i32>} : memref<1x1x1x128xf32, #tpu.memory_space<vmem>>, vector<1x1x1x128xf32>,
    %cst_32 = arith.constant 0.000000e+00 : f32
    %67 = vector.broadcast %cst_32 : f32 to vector<3x2x128xf32>
    %68 = arith.subf %67, %5 : vector<3x2x128xf32>
    %69 = math.exp %68 : vector<3x2x128xf32>
    %cst_33 = arith.constant 1.000000e+00 : f32
    %70 = vector.broadcast %cst_33 : f32 to vector<3x2x128xf32>
    %71 = arith.addf %70, %69 : vector<3x2x128xf32>
    %72 = tpu.reciprocal %71 {approx = true} : vector<3x2x128xf32> -> vector<3x2x128xf32>
    %73 = vector.shape_cast %15 : vector<2x128xf32> to vector<1x2x128xf32>
    %74 = vector.broadcast %73 : vector<1x2x128xf32> to vector<3x2x128xf32>
    %75 = arith.mulf %37, %74 : vector<3x2x128xf32>
    %76 = vector.shape_cast %15 : vector<2x128xf32> to vector<1x2x128xf32>
    %77 = vector.broadcast %76 : vector<1x2x128xf32> to vector<3x2x128xf32>
    %78 = arith.mulf %72, %77 : vector<3x2x128xf32>
    %c0_34 = arith.constant 0 : index
    %c0_35 = arith.constant 0 : index
    %c0_36 = arith.constant 0 : index
    %c0_37 = arith.constant 0 : index
    %79 = vector.load %arg6[%c0_34, %c0_35, %c0_36, %c0_37] : memref<1x1x3x128xf32, #tpu.memory_space<vmem>>, vector<1x1x3x128xf32>
    %80 = vector.shape_cast %79 : vector<1x1x3x128xf32> to vector<3x128xf32>
    %81 = arith.mulf %72, %75 : vector<3x2x128xf32>
    %cst_38 = arith.constant dense<0.000000e+00> : vector<3x128xf32>
    %82 = vector.multi_reduction <add>, %81, %cst_38 [1] : vector<3x2x128xf32> to vector<3x128xf32>
    %83 = arith.addf %80, %82 : vector<3x128xf32>
    %c0_39 = arith.constant 0 : index
    %c0_40 = arith.constant 0 : index
    %c0_41 = arith.constant 0 : index
    %c0_42 = arith.constant 0 : index
    %84 = vector.load %arg6[%c0_39, %c0_40, %c0_41, %c0_42] : memref<1x1x3x128xf32, #tpu.memory_space<vmem>>, vector<1x1x3x128xf32>
    %85 = vector.shape_cast %84 : vector<1x1x3x128xf32> to vector<3x128xf32>
    %86 = vector.shape_cast %83 : vector<3x128xf32> to vector<1x1x3x128xf32>
    tpu.vector_store %arg6[%c0_39, %c0_40, %c0_41, %c0_42], %86 {strides = array<i32>} : memref<1x1x3x128xf32, #tpu.memory_space<vmem>>, vector<1x1x3x128xf32>,
    %c0_43 = arith.constant 0 : index
    %c0_44 = arith.constant 0 : index
    %c0_45 = arith.constant 0 : index
    %c0_46 = arith.constant 0 : index
    %87 = vector.load %arg7[%c0_43, %c0_44, %c0_45, %c0_46] : memref<1x1x3x128xf32, #tpu.memory_space<vmem>>, vector<1x1x3x128xf32>
    %88 = vector.shape_cast %87 : vector<1x1x3x128xf32> to vector<3x128xf32>
    %cst_47 = arith.constant dense<0.000000e+00> : vector<3x128xf32>
    %89 = vector.multi_reduction <add>, %78, %cst_47 [1] : vector<3x2x128xf32> to vector<3x128xf32>
    %90 = arith.addf %88, %89 : vector<3x128xf32>
    %c0_48 = arith.constant 0 : index
    %c0_49 = arith.constant 0 : index
    %c0_50 = arith.constant 0 : index
    %c0_51 = arith.constant 0 : index
    %91 = vector.load %arg7[%c0_48, %c0_49, %c0_50, %c0_51] : memref<1x1x3x128xf32, #tpu.memory_space<vmem>>, vector<1x1x3x128xf32>
    %92 = vector.shape_cast %91 : vector<1x1x3x128xf32> to vector<3x128xf32>
    %93 = vector.shape_cast %90 : vector<3x128xf32> to vector<1x1x3x128xf32>
    tpu.vector_store %arg7[%c0_48, %c0_49, %c0_50, %c0_51], %93 {strides = array<i32>} : memref<1x1x3x128xf32, #tpu.memory_space<vmem>>, vector<1x1x3x128xf32>,
    %c0_52 = arith.constant 0 : index
    %c0_53 = arith.constant 0 : index
    %c0_54 = arith.constant 0 : index
    %c0_55 = arith.constant 0 : index
    %94 = vector.load %arg8[%c0_52, %c0_53, %c0_54, %c0_55] : memref<1x1x3x128xf32, #tpu.memory_space<vmem>>, vector<1x1x3x128xf32>
    %95 = vector.shape_cast %94 : vector<1x1x3x128xf32> to vector<3x128xf32>
    %cst_56 = arith.constant dense<0.000000e+00> : vector<3x128xf32>
    %96 = vector.multi_reduction <add>, %75, %cst_56 [1] : vector<3x2x128xf32> to vector<3x128xf32>
    %97 = arith.addf %95, %96 : vector<3x128xf32>
    %c0_57 = arith.constant 0 : index
    %c0_58 = arith.constant 0 : index
    %c0_59 = arith.constant 0 : index
    %c0_60 = arith.constant 0 : index
    %98 = vector.load %arg8[%c0_57, %c0_58, %c0_59, %c0_60] : memref<1x1x3x128xf32, #tpu.memory_space<vmem>>, vector<1x1x3x128xf32>
    %99 = vector.shape_cast %98 : vector<1x1x3x128xf32> to vector<3x128xf32>
    %100 = vector.shape_cast %97 : vector<3x128xf32> to vector<1x1x3x128xf32>
    tpu.vector_store %arg8[%c0_57, %c0_58, %c0_59, %c0_60], %100 {strides = array<i32>} : memref<1x1x3x128xf32, #tpu.memory_space<vmem>>, vector<1x1x3x128xf32>,
    return
  }
  func.func @transform_0(%arg0: i32, %arg1: i32, %arg2: i32) -> (i32, i32, i32, i32) {
    %c1_i32 = arith.constant 1 : i32
    %0 = arith.muli %arg1, %c1_i32 : i32
    %1 = arith.addi %0, %arg2 : i32
    %c0_i32 = arith.constant 0 : i32
    %c0_i32_0 = arith.constant 0 : i32
    %c0_i32_1 = arith.constant 0 : i32
    return %arg0, %c0_i32, %1, %c0_i32_0 : i32, i32, i32, i32
  }
  func.func @transform_1(%arg0: i32, %arg1: i32, %arg2: i32) -> (i32, i32, i32) {
    %c1_i32 = arith.constant 1 : i32
    %0 = arith.muli %arg1, %c1_i32 : i32
    %1 = arith.addi %0, %arg2 : i32
    %c0_i32 = arith.constant 0 : i32
    %c0_i32_0 = arith.constant 0 : i32
    return %arg0, %1, %c0_i32 : i32, i32, i32
  }
  func.func @transform_2(%arg0: i32, %arg1: i32, %arg2: i32) -> i32 {
    %c0_i32 = arith.constant 0 : i32
    %c0_i32_0 = arith.constant 0 : i32
    return %c0_i32 : i32
  }
  func.func @transform_3(%arg0: i32, %arg1: i32, %arg2: i32) -> (i32, i32, i32, i32) {
    %c0_i32 = arith.constant 0 : i32
    %c0_i32_0 = arith.constant 0 : i32
    %c0_i32_1 = arith.constant 0 : i32
    return %arg0, %arg1, %c0_i32, %c0_i32_0 : i32, i32, i32, i32
  }
  func.func @transform_4(%arg0: i32, %arg1: i32, %arg2: i32) -> (i32, i32, i32, i32) {
    %c0_i32 = arith.constant 0 : i32
    %c0_i32_0 = arith.constant 0 : i32
    %c0_i32_1 = arith.constant 0 : i32
    return %arg0, %arg1, %c0_i32, %c0_i32_0 : i32, i32, i32, i32
  }
  func.func @transform_5(%arg0: i32, %arg1: i32, %arg2: i32) -> (i32, i32, i32, i32) {
    %c0_i32 = arith.constant 0 : i32
    %c0_i32_0 = arith.constant 0 : i32
    %c0_i32_1 = arith.constant 0 : i32
    return %arg0, %arg1, %c0_i32, %c0_i32_0 : i32, i32, i32, i32
  }
  func.func @transform_6(%arg0: i32, %arg1: i32, %arg2: i32) -> (i32, i32, i32, i32) {
    %c0_i32 = arith.constant 0 : i32
    %c0_i32_0 = arith.constant 0 : i32
    %c0_i32_1 = arith.constant 0 : i32
    return %arg0, %arg1, %c0_i32, %c0_i32_0 : i32, i32, i32, i32
  }
  func.func @transform_7(%arg0: i32, %arg1: i32, %arg2: i32) -> (i32, i32, i32, i32) {
    %c0_i32 = arith.constant 0 : i32
    %c0_i32_0 = arith.constant 0 : i32
    %c0_i32_1 = arith.constant 0 : i32
    return %arg0, %arg1, %c0_i32, %c0_i32_0 : i32, i32, i32, i32
  }
}

</mosaic_0001>

<llo_original>
// kernel: tpu_custom_call.1
$region0: #{tpu_custom_call.1}
  #allocation0 [shape = 'u32[]', space=smem, size = 0x4, offset = 0x4, fixed_abs, tag = 'smem constant byte address 0x4 - core index']
  #allocation1 [shape = 'u32[72,128]{1,0:T(1,128)}', space=vmem, size = 0x9000, scoped, tag = 'internal scratch']
  %s0 = inlined_call_operand.hbm [shape: bf16[2,3,2,128], index: 0, kind: input, shape index: {}]
  %s1 = inlined_call_operand.hbm [shape: s8[2,2,128], index: 1, kind: input, shape index: {}]
  %s2 = inlined_call_operand.vmem [shape: f32[3], index: 2, kind: input, shape index: {}]
  %s3 = inlined_call_operand.vmem [shape: f32[2,1,3,128], index: 3, kind: output, shape index: {0}]
  %s4 = inlined_call_operand.vmem [shape: f32[2,1,3,128], index: 4, kind: output, shape index: {1}]
  %s5 = inlined_call_operand.vmem [shape: f32[2,1,3,128], index: 5, kind: output, shape index: {2}]
  %s6 = inlined_call_operand.hbm [shape: f32[2,1,1,128], index: 6, kind: output, shape index: {3}]
  %s7 = inlined_call_operand.hbm [shape: f32[2,1,1,128], index: 7, kind: output, shape index: {4}]
  %8 = xla_tuple %s3, %s4, %s5, %s6, %s7
  %s9 = sld [smem:[#allocation0]]
  $region93: #{tpu_custom_call.1} parent=0
    _
  %s11 = ssub.s32 1, %s9
  %s12 = scalar_select 0, %s11, %s9
  $region1: #{tpu_custom_call.1} parent=0
    #allocation2 [shape = 'u8[3072]{0}', space=vmem, size = 0xc00, scoped, tag = 'input window, operand 0']
    #allocation3 [shape = 's32[2]{0}', space=sflag, size = 0x8, scoped, tag = 'scoped memory for tpu_custom_call.1']
    #allocation4 [shape = 's32[2]{0}', space=sflag, size = 0x8, scoped, tag = 'scoped memory for tpu_custom_call.1']
    #allocation5 [shape = 's32[2]{0}', space=sflag, size = 0x8, scoped, tag = 'scoped memory for tpu_custom_call.1']
    #allocation6 [shape = 'u8[1024]{0}', space=vmem, size = 0x400, scoped, tag = 'input window, operand 1']
    #allocation7 [shape = 's32[2]{0}', space=sflag, size = 0x8, scoped, tag = 'scoped memory for tpu_custom_call.1']
    #allocation8 [shape = 'u8[512]{0}', space=smem, size = 0x200, scoped, tag = 'input window, operand 2, single buffered']
    #allocation9 [shape = 'u8[1024]{0}', space=vmem, size = 0x400, scoped, tag = 'output window, operand 3']
    #allocation10 [shape = 'u8[1024]{0}', space=vmem, size = 0x400, scoped, tag = 'output window, operand 4']
    #allocation11 [shape = 's32[2]{0}', space=sflag, size = 0x8, scoped, tag = 'scoped memory for tpu_custom_call.1']
    %13 = vsyncpa [#allocation3], 0
    %s14 = scalar_lea.sflag [#allocation3], 1
    %15 = vsyncpa %s14, 0
    %16 = vsyncpa [#allocation7], 0
    %s17 = scalar_lea.sflag [#allocation7], 1
    %18 = vsyncpa %s17, 0
    %19 = vsyncpa [#allocation5], 0
    %20 = vsyncpa [#allocation4], 0
    %s21 = scalar_lea.sflag [#allocation4], 1
    %22 = vsyncpa %s21, 0
    %23 = vsyncpa [#allocation11], 0
    %s24 = scalar_lea.sflag [#allocation11], 1
    %25 = vsyncpa %s24, 0
    loop: start=0, step=1, limit=4
    $region2: #{tpu_custom_call.1} parent=1 // loop_pre_header
      _
    $region3: #{tpu_custom_call.1} parent=1 // loop_header
      %s27 = sphi 0, %s31
      %p28 = scmp.ge.s32.totalorder %s27, 4
      %s34 = sphi 0, %s53
      %s35 = sphi 0, %s49
      %s36 = sphi 0, %s45
      %s37 = sphi 0, %s34
      %s38 = sphi 0, %s35
      %s39 = sphi 0, %s36
      %s40 = sphi 0, %s37
      %s41 = sphi 0, %s38
      %s42 = sphi 0, %s39
      %s60 = sphi 0, %s62
      %s63 = sphi 0, %s60
      %s64 = sphi 0, %s63
      %s80 = sphi 0, %s64
      %s90 = sphi 0, %s92
      %s93 = sphi 0, %s90
      %s94 = sphi 0, %s93
      %s110 = sphi 0, %s94
      %s114 = sphi 0, %s114
      %s116 = sphi 0, %s114
      %s117 = sphi 0, %s116
      %s131 = sphi 0, %s117
      %s139 = sphi 0, %s141
      %s142 = sphi 0, %s139
      %s143 = sphi 0, %s142
      %s159 = sphi 0, %s143
      %s167 = sphi 0, %s169
      %s170 = sphi 0, %s167
      %s171 = sphi 0, %s170
      %s187 = sphi 0, %s171
      %s195 = sphi 0, %s197
      %s198 = sphi 0, %s195
      %s199 = sphi 0, %s198
      %s215 = sphi 0, %s199
      %s223 = sphi 0, %s225
      %s226 = sphi 0, %s223
      %s227 = sphi 0, %s226
      %s243 = sphi 0, %s227
      %s251 = sphi 0, %s253
      %s254 = sphi 0, %s251
      %s255 = sphi 0, %s254
      %s271 = sphi 0, %s255
    $region4: #{tpu_custom_call.1} parent=1 // loop_header_branch
      %30 = sbr.rel (%p28) target = $region8
    $region5: #{tpu_custom_call.1} parent=1 // loop_body
      %s32 = ssub.s32 %s27, 1
      %s33 = ssub.s32 %s27, 2
      %s43 = sadd.s32 1, %s36
      %p44 = scmp.ge.s32.totalorder %s43, 1
      %s45 = scalar_select %p44, 0, %s43
      %s46 = sadd.s32 1, %s35
      %s47 = scalar_select %p44, %s46, %s35
      %p48 = scmp.ge.s32.totalorder %s47, 1
      %s49 = scalar_select %p48, 0, %s47
      %s50 = sadd.s32 1, %s34
      %s51 = scalar_select %p48, %s50, %s34
      %p52 = scmp.ge.s32.totalorder %s51, 2
      %s53 = scalar_select %p52, 0, %s51
      %s54 = sadd.s32 %s35, %s36
      %s55 = sadd.s32 %s49, %s45
      %s56 = ssub.s32 %s34, %s53
      %s57 = ssub.s32 %s54, %s55
      %s58 = sor.u32 %s56, %s57
      %p59 = scmp.eq.s32.totalorder %s58, 0
      %s61 = sadd.s32 %s60, 1
      %s62 = scalar_select %p59, %s60, %s61
      %p65 = pneg %p59
      %p66 = scmp.eq.s32.totalorder %s27, 1
      %p67 = por %p65, %p66
      %p68 = scmp.ne.s32.totalorder %s60, %s63
      %p69 = scmp.eq.s32.totalorder %s27, 0
      %p70 = por %p68, %p69
      %p71 = scmp.ne.s32.totalorder %s60, %s63
      %p72 = scmp.eq.s32.totalorder %s32, 1
      %p73 = por %p71, %p72
      %p74 = scmp.ne.s32.totalorder %s63, %s64
      %p75 = scmp.eq.s32.totalorder %s32, 0
      %p76 = por %p74, %p75
      %p77 = scmp.ne.s32.totalorder %s63, %s64
      %p78 = scmp.eq.s32.totalorder %s33, 1
      %p79 = por %p77, %p78
      %p81 = scmp.ne.s32.totalorder %s64, %s80
      %p82 = scmp.eq.s32.totalorder %s33, 0
      %p83 = por %p81, %p82
      %s84 = sadd.s32 %s35, %s36
      %s85 = sadd.s32 %s49, %s45
      %s86 = ssub.s32 %s34, %s53
      %s87 = ssub.s32 %s84, %s85
      %s88 = sor.u32 %s86, %s87
      %p89 = scmp.eq.s32.totalorder %s88, 0
      %s91 = sadd.s32 %s90, 1
      %s92 = scalar_select %p89, %s90, %s91
      %p95 = pneg %p89
      %p96 = scmp.eq.s32.totalorder %s27, 1
      %p97 = por %p95, %p96
      %p98 = scmp.ne.s32.totalorder %s90, %s93
      %p99 = scmp.eq.s32.totalorder %s27, 0
      %p100 = por %p98, %p99
      %p101 = scmp.ne.s32.totalorder %s90, %s93
      %p102 = scmp.eq.s32.totalorder %s32, 1
      %p103 = por %p101, %p102
      %p104 = scmp.ne.s32.totalorder %s93, %s94
      %p105 = scmp.eq.s32.totalorder %s32, 0
      %p106 = por %p104, %p105
      %p107 = scmp.ne.s32.totalorder %s93, %s94
      %p108 = scmp.eq.s32.totalorder %s33, 1
      %p109 = por %p107, %p108
      %p111 = scmp.ne.s32.totalorder %s94, %s110
      %p112 = scmp.eq.s32.totalorder %s33, 0
      %p113 = por %p111, %p112
      %s115 = sadd.s32 %s114, 1
      %p118 = scmp.eq.s32.totalorder %s27, 1
      %p119 = scmp.ne.s32.totalorder %s114, %s116
      %p120 = scmp.eq.s32.totalorder %s27, 0
      %p121 = por %p119, %p120
      %p122 = scmp.ne.s32.totalorder %s114, %s116
      %p123 = scmp.eq.s32.totalorder %s32, 1
      %p124 = por %p122, %p123
      %p125 = scmp.ne.s32.totalorder %s116, %s117
      %p126 = scmp.eq.s32.totalorder %s32, 0
      %p127 = por %p125, %p126
      %p128 = scmp.ne.s32.totalorder %s116, %s117
      %p129 = scmp.eq.s32.totalorder %s33, 1
      %p130 = por %p128, %p129
      %p132 = scmp.ne.s32.totalorder %s117, %s131
      %p133 = scmp.eq.s32.totalorder %s33, 0
      %p134 = por %p132, %p133
      %s135 = ssub.s32 %s34, %s53
      %s136 = ssub.s32 %s35, %s49
      %s137 = sor.u32 %s135, %s136
      %p138 = scmp.eq.s32.totalorder %s137, 0
      %s140 = sadd.s32 %s139, 1
      %s141 = scalar_select %p138, %s139, %s140
      %p144 = pneg %p138
      %p145 = scmp.eq.s32.totalorder %s27, 1
      %p146 = por %p144, %p145
      %p147 = scmp.ne.s32.totalorder %s139, %s142
      %p148 = scmp.eq.s32.totalorder %s27, 0
      %p149 = por %p147, %p148
      %p150 = scmp.ne.s32.totalorder %s139, %s142
      %p151 = scmp.eq.s32.totalorder %s32, 1
      %p152 = por %p150, %p151
      %p153 = scmp.ne.s32.totalorder %s142, %s143
      %p154 = scmp.eq.s32.totalorder %s32, 0
      %p155 = por %p153, %p154
      %p156 = scmp.ne.s32.totalorder %s142, %s143
      %p157 = scmp.eq.s32.totalorder %s33, 1
      %p158 = por %p156, %p157
      %p160 = scmp.ne.s32.totalorder %s143, %s159
      %p161 = scmp.eq.s32.totalorder %s33, 0
      %p162 = por %p160, %p161
      %s163 = ssub.s32 %s34, %s53
      %s164 = ssub.s32 %s35, %s49
      %s165 = sor.u32 %s163, %s164
      %p166 = scmp.eq.s32.totalorder %s165, 0
      %s168 = sadd.s32 %s167, 1
      %s169 = scalar_select %p166, %s167, %s168
      %p172 = pneg %p166
      %p173 = scmp.eq.s32.totalorder %s27, 1
      %p174 = por %p172, %p173
      %p175 = scmp.ne.s32.totalorder %s167, %s170
      %p176 = scmp.eq.s32.totalorder %s27, 0
      %p177 = por %p175, %p176
      %p178 = scmp.ne.s32.totalorder %s167, %s170
      %p179 = scmp.eq.s32.totalorder %s32, 1
      %p180 = por %p178, %p179
      %p181 = scmp.ne.s32.totalorder %s170, %s171
      %p182 = scmp.eq.s32.totalorder %s32, 0
      %p183 = por %p181, %p182
      %p184 = scmp.ne.s32.totalorder %s170, %s171
      %p185 = scmp.eq.s32.totalorder %s33, 1
      %p186 = por %p184, %p185
      %p188 = scmp.ne.s32.totalorder %s171, %s187
      %p189 = scmp.eq.s32.totalorder %s33, 0
      %p190 = por %p188, %p189
      %s191 = ssub.s32 %s34, %s53
      %s192 = ssub.s32 %s35, %s49
      %s193 = sor.u32 %s191, %s192
      %p194 = scmp.eq.s32.totalorder %s193, 0
      %s196 = sadd.s32 %s195, 1
      %s197 = scalar_select %p194, %s195, %s196
      %p200 = pneg %p194
      %p201 = scmp.eq.s32.totalorder %s27, 1
      %p202 = por %p200, %p201
      %p203 = scmp.ne.s32.totalorder %s195, %s198
      %p204 = scmp.eq.s32.totalorder %s27, 0
      %p205 = por %p203, %p204
      %p206 = scmp.ne.s32.totalorder %s195, %s198
      %p207 = scmp.eq.s32.totalorder %s32, 1
      %p208 = por %p206, %p207
      %p209 = scmp.ne.s32.totalorder %s198, %s199
      %p210 = scmp.eq.s32.totalorder %s32, 0
      %p211 = por %p209, %p210
      %p212 = scmp.ne.s32.totalorder %s198, %s199
      %p213 = scmp.eq.s32.totalorder %s33, 1
      %p214 = por %p212, %p213
      %p216 = scmp.ne.s32.totalorder %s199, %s215
      %p217 = scmp.eq.s32.totalorder %s33, 0
      %p218 = por %p216, %p217
      %s219 = ssub.s32 %s34, %s53
      %s220 = ssub.s32 %s35, %s49
      %s221 = sor.u32 %s219, %s220
      %p222 = scmp.eq.s32.totalorder %s221, 0
      %s224 = sadd.s32 %s223, 1
      %s225 = scalar_select %p222, %s223, %s224
      %p228 = pneg %p222
      %p229 = scmp.eq.s32.totalorder %s27, 1
      %p230 = por %p228, %p229
      %p231 = scmp.ne.s32.totalorder %s223, %s226
      %p232 = scmp.eq.s32.totalorder %s27, 0
      %p233 = por %p231, %p232
      %p234 = scmp.ne.s32.totalorder %s223, %s226
      %p235 = scmp.eq.s32.totalorder %s32, 1
      %p236 = por %p234, %p235
      %p237 = scmp.ne.s32.totalorder %s226, %s227
      %p238 = scmp.eq.s32.totalorder %s32, 0
      %p239 = por %p237, %p238
      %p240 = scmp.ne.s32.totalorder %s226, %s227
      %p241 = scmp.eq.s32.totalorder %s33, 1
      %p242 = por %p240, %p241
      %p244 = scmp.ne.s32.totalorder %s227, %s243
      %p245 = scmp.eq.s32.totalorder %s33, 0
      %p246 = por %p244, %p245
      %s247 = ssub.s32 %s34, %s53
      %s248 = ssub.s32 %s35, %s49
      %s249 = sor.u32 %s247, %s248
      %p250 = scmp.eq.s32.totalorder %s249, 0
      %s252 = sadd.s32 %s251, 1
      %s253 = scalar_select %p250, %s251, %s252
      %p256 = pneg %p250
      %p257 = scmp.eq.s32.totalorder %s27, 1
      %p258 = por %p256, %p257
      %p259 = scmp.ne.s32.totalorder %s251, %s254
      %p260 = scmp.eq.s32.totalorder %s27, 0
      %p261 = por %p259, %p260
      %p262 = scmp.ne.s32.totalorder %s251, %s254
      %p263 = scmp.eq.s32.totalorder %s32, 1
      %p264 = por %p262, %p263
      %p265 = scmp.ne.s32.totalorder %s254, %s255
      %p266 = scmp.eq.s32.totalorder %s32, 0
      %p267 = por %p265, %p266
      %p268 = scmp.ne.s32.totalorder %s254, %s255
      %p269 = scmp.eq.s32.totalorder %s33, 1
      %p270 = por %p268, %p269
      %p272 = scmp.ne.s32.totalorder %s255, %s271
      %p273 = scmp.eq.s32.totalorder %s33, 0
      %p274 = por %p272, %p273
      %p275 = scmp.le.s32.totalorder 1, %s27
      %p276 = scmp.lt.s32.totalorder %s27, 3
      %p277 = pnand %p275, %p276
      %p278 = pneg %p277
      // Predicated region
      $region9: #{tpu_custom_call.1} parent=5 // pred_check
        _
      $region10: #{tpu_custom_call.1} parent=5 // pred_check_branch
        %280 = sbr.rel (%p277) target = $region12
      $region11: #{tpu_custom_call.1} parent=5 // pred_region
        %s281 = ssub.s32 %s27, 1
        // Predicated region
        $region13: #{tpu_custom_call.1} parent=11 // pred_check
          %p282 = pneg %p127
        $region14: #{tpu_custom_call.1} parent=11 // pred_check_branch
          %284 = sbr.rel (%p282) target = $region16
        $region15: #{tpu_custom_call.1} parent=11 // pred_region
          %286 = vsyncadd [#allocation5], 0
          %s288 = sshll.u32 %s2, 4
          %s289 = int_to_ptr.vmem [resolvable:$true] %s288
          %291 = dma.vmem_to_smem %s289, 16, [#allocation8], [#allocation5]
        $region16: #{tpu_custom_call.1} parent=11 // pred_fallthru
          _
      $region12: #{tpu_custom_call.1} parent=5 // pred_fallthru
        _
      %p292 = scmp.lt.s32.totalorder %s27, 2
      // Predicated region
      $region17: #{tpu_custom_call.1} parent=5 // pred_check
        %p293 = pneg %p292
      $region18: #{tpu_custom_call.1} parent=5 // pred_check_branch
        %295 = sbr.rel (%p293) target = $region20
      $region19: #{tpu_custom_call.1} parent=5 // pred_region
        // Predicated region
        $region21: #{tpu_custom_call.1} parent=19 // pred_check
          %p296 = pneg %p70
        $region22: #{tpu_custom_call.1} parent=19 // pred_check_branch
          %298 = sbr.rel (%p296) target = $region24
        $region23: #{tpu_custom_call.1} parent=19 // pred_region
          %s299 = sand.u32 %s60, 1
          %s300 = scalar_lea.sflag [#allocation3], %s299
          %s301 = sand.u32 %s60, 1
          %s302 = smul.addr %s301, 3
          %s303 = scalar_lea.vmem [#allocation2], %s302
          %s304 = sadd.s32 %s35, %s36
          %306 = vsyncadd %s300, 0
          %s307 = smul.addr %s34, 3
          %s308 = sadd.s32 %s304, %s307
          %s309 = scalar_lea.hbm %s0, %s308
          %s310 = sshll.u32 %s309, 4
          %s311 = int_to_ptr.hbm [resolvable:$true] %s310
          %s312 = sshll.u32 %s303, 4
          %s313 = int_to_ptr.vmem [resolvable:$true] %s312
          %318 = dma.hbm_to_vmem [thread:$0]  %s311, 48, %s313, %s300, 16, 16, 1
        $region24: #{tpu_custom_call.1} parent=19 // pred_fallthru
          _
        // Predicated region
        $region25: #{tpu_custom_call.1} parent=19 // pred_check
          %p319 = pneg %p100
        $region26: #{tpu_custom_call.1} parent=19 // pred_check_branch
          %321 = sbr.rel (%p319) target = $region28
        $region27: #{tpu_custom_call.1} parent=19 // pred_region
          %s322 = sand.u32 %s90, 1
          %s323 = scalar_lea.sflag [#allocation7], %s322
          %s324 = sand.u32 %s90, 1
          %s325 = scalar_lea.vmem [#allocation6], %s324
          %s326 = sadd.s32 %s35, %s36
          %328 = vsyncadd %s323, 0
          %s329 = sadd.s32 %s326, %s34
          %s330 = scalar_lea.hbm %s1, %s329
          %s332 = sshll.u32 %s330, 4
          %s333 = int_to_ptr.hbm [resolvable:$true] %s332
          %s334 = sshll.u32 %s325, 4
          %s335 = int_to_ptr.vmem [resolvable:$true] %s334
          %337 = dma.hbm_to_vmem [thread:$0]  %s333, 16, %s335, %s323
        $region28: #{tpu_custom_call.1} parent=19 // pred_fallthru
          _
      $region20: #{tpu_custom_call.1} parent=5 // pred_fallthru
        _
      %p338 = scmp.le.s32.totalorder 1, %s27
      %p339 = scmp.lt.s32.totalorder %s27, 3
      %p340 = pnand %p338, %p339
      %p341 = pneg %p340
      // Predicated region
      $region29: #{tpu_custom_call.1} parent=5 // pred_check
        _
      $region30: #{tpu_custom_call.1} parent=5 // pred_check_branch
        %343 = sbr.rel (%p340) target = $region32
      $region31: #{tpu_custom_call.1} parent=5 // pred_region
        %s344 = ssub.s32 %s27, 1
        %s345 = sand.u32 %s63, 1
        %s346 = scalar_lea.sflag [#allocation3], %s345
        %s347 = sand.u32 %s63, 1
        %s348 = smul.addr %s347, 3
        %s349 = scalar_lea.vmem [#allocation2], %s348
        // Predicated region
        $region33: #{tpu_custom_call.1} parent=31 // pred_check
          %p350 = pneg %p76
        $region34: #{tpu_custom_call.1} parent=31 // pred_check_branch
          %352 = sbr.rel (%p350) target = $region36
        $region35: #{tpu_custom_call.1} parent=31 // pred_region
          %354 = dma.done %s346, 48
        $region36: #{tpu_custom_call.1} parent=31 // pred_fallthru
          _
        %s355 = sand.u32 %s93, 1
        %s356 = scalar_lea.sflag [#allocation7], %s355
        %s357 = sand.u32 %s93, 1
        %s358 = scalar_lea.vmem [#allocation6], %s357
        // Predicated region
        $region37: #{tpu_custom_call.1} parent=31 // pred_check
          %p359 = pneg %p106
        $region38: #{tpu_custom_call.1} parent=31 // pred_check_branch
          %361 = sbr.rel (%p359) target = $region40
        $region39: #{tpu_custom_call.1} parent=31 // pred_region
          %363 = dma.done %s356, 16
        $region40: #{tpu_custom_call.1} parent=31 // pred_fallthru
          _
        // Predicated region
        $region41: #{tpu_custom_call.1} parent=31 // pred_check
          %p364 = pneg %p127
        $region42: #{tpu_custom_call.1} parent=31 // pred_check_branch
          %366 = sbr.rel (%p364) target = $region44
        $region43: #{tpu_custom_call.1} parent=31 // pred_region
          %368 = dma.done [#allocation5], 16
        $region44: #{tpu_custom_call.1} parent=31 // pred_fallthru
          _
        %369 = sfence
        %s370 = sand.u32 %s63, 1
        %s371 = scalar_lea.sflag [#allocation3], %s370
        %s372 = sand.u32 %s63, 1
        %s373 = smul.addr %s372, 3
        %s374 = scalar_lea.vmem [#allocation2], %s373
        %p375 = pneg %p76
        %p376 = pneg %p73
        %s377 = sand.u32 %s93, 1
        %s378 = scalar_lea.sflag [#allocation7], %s377
        %s379 = sand.u32 %s93, 1
        %s380 = scalar_lea.vmem [#allocation6], %s379
        %p381 = pneg %p106
        %p382 = pneg %p103
        %p383 = pneg %p127
        %p384 = pneg %p124
        %p385 = pneg %p155
        %p386 = pneg %p152
        %p387 = scmp.lt.s32.totalorder %s37, 1
        %s388 = scalar_select %p387, %s37, 1
        %p389 = scmp.lt.s32.totalorder %s38, 0
        %s390 = scalar_select %p389, %s38, 0
        %s391 = sadd.s32 %s390, %s388
        %s392 = smul.addr %s391, 4
        %s393 = scalar_lea.vmem %s3, %s392
        %p394 = pneg %p183
        %p395 = pneg %p180
        %p396 = scmp.lt.s32.totalorder %s37, 1
        %s397 = scalar_select %p396, %s37, 1
        %p398 = scmp.lt.s32.totalorder %s38, 0
        %s399 = scalar_select %p398, %s38, 0
        %s400 = sadd.s32 %s399, %s397
        %s401 = smul.addr %s400, 4
        %s402 = scalar_lea.vmem %s4, %s401
        %p403 = pneg %p211
        %p404 = pneg %p208
        %p405 = scmp.lt.s32.totalorder %s37, 1
        %s406 = scalar_select %p405, %s37, 1
        %p407 = scmp.lt.s32.totalorder %s38, 0
        %s408 = scalar_select %p407, %s38, 0
        %s409 = sadd.s32 %s408, %s406
        %s410 = smul.addr %s409, 4
        %s411 = scalar_lea.vmem %s5, %s410
        %p412 = pneg %p239
        %p413 = pneg %p236
        %s414 = sand.u32 %s226, 1
        %s415 = scalar_lea.sflag [#allocation4], %s414
        %s416 = sand.u32 %s226, 1
        %s417 = scalar_lea.vmem [#allocation9], %s416
        %p418 = pneg %p267
        %p419 = pneg %p264
        %s420 = sand.u32 %s254, 1
        %s421 = scalar_lea.sflag [#allocation11], %s420
        %s422 = sand.u32 %s254, 1
        %s423 = scalar_lea.vmem [#allocation10], %s422
        %s424 = sadd.s32 %s38, %s39
        %s425 = sadd.s32 %s38, %s39
        %p426 = scmp.lt.s32.totalorder %s37, 1
        %s427 = scalar_select %p426, %s37, 1
        %p428 = scmp.lt.s32.totalorder %s38, 0
        %s429 = scalar_select %p428, %s38, 0
        %s430 = sadd.s32 %s429, %s427
        %s431 = smul.addr %s430, 4
        %s432 = scalar_lea.vmem %s3, %s431
        %p433 = scmp.lt.s32.totalorder %s37, 1
        %s434 = scalar_select %p433, %s37, 1
        %p435 = scmp.lt.s32.totalorder %s38, 0
        %s436 = scalar_select %p435, %s38, 0
        %s437 = sadd.s32 %s436, %s434
        %s438 = smul.addr %s437, 4
        %s439 = scalar_lea.vmem %s4, %s438
        %p440 = scmp.lt.s32.totalorder %s37, 1
        %s441 = scalar_select %p440, %s37, 1
        %p442 = scmp.lt.s32.totalorder %s38, 0
        %s443 = scalar_select %p442, %s38, 0
        %s444 = sadd.s32 %s443, %s441
        %s445 = smul.addr %s444, 4
        %s446 = scalar_lea.vmem %s5, %s445
        %p447 = scmp.eq.s32.totalorder %s39, 0
        // Predicated region
        $region45: #{tpu_custom_call.1} parent=31 // pred_check
          %p448 = pneg %p447
        $region46: #{tpu_custom_call.1} parent=31 // pred_check_branch
          %450 = sbr.rel (%p448) target = $region48
        $region47: #{tpu_custom_call.1} parent=31 // pred_region
          %451 = vst [vmem:[%s432] sm:$0x7] 0.0
          %452 = vst [vmem:[%s439] sm:$0x7] 0.0
          %453 = vst [vmem:[%s446] sm:$0x7] 0.0
          %454 = vst [vmem:[%s417] sm:$0x1] 0.0
          %455 = vst [vmem:[%s423] sm:$0x1] 0.0
        $region48: #{tpu_custom_call.1} parent=31 // pred_fallthru
          _
        %v456 = vld [vmem:[%s349] sm:$0x1]
        %v457 = vld [vmem:[%s349 + $0x1] sm:$0x1]
        %v458 = vld [vmem:[%s349 + $0x2] sm:$0x1]
        %v459 = vunpack.c.l.bf16 %v456
        %v460 = vunpack.c.l.bf16 %v457
        %v461 = vunpack.c.l.bf16 %v458
        %v462 = vld [vmem:[%s358] sm:$0x1]
        %v463 = vunpack.c.0.s8 %v462
        %vm464 = vcmp.ge.s32.totalorder %v463, 0
        %vm465 = vcmp.ne.s32.totalorder %v463, 2
        %vm466 = vmand %vm464, %vm465
        %v467 = vsel %vm466, 1, 0
        %v468 = vcvt.s32.f32 %v467
        %vm469 = vcmp.eq.s32.totalorder %v463, 0
        %s470 = sld [smem:[#allocation8]]
        %v471 = vstv %s470
        %v472 = vsel %vm469, %v471, 0.0
        %vm473 = vcmp.eq.s32.totalorder %v463, 1
        %s474 = sld [smem:[#allocation8 + $0x1]]
        %v475 = vstv %s474
        %v476 = vsel %vm473, %v475, %v472
        %vm477 = vcmp.eq.s32.totalorder %v463, 2
        %s478 = sld [smem:[#allocation8 + $0x2]]
        %v479 = vstv %s478
        %v480 = vsel %vm477, %v479, %v476
        %v481 = vsel %vm469, 1, 0
        %v482 = vsel %vm473, 1, 0
        %v483 = vsel %vm477, 1, 0
        %v484 = vcvt.s32.f32 %v481
        %v485 = vcvt.s32.f32 %v482
        %v486 = vcvt.s32.f32 %v483
        %vm487 = vcmask 1041408
        %v488 = vsel %vm487, %v459, -inf
        %v489 = vsel %vm487, %v460, -inf
        %v490 = vsel %vm487, %v461, -inf
        %v491 = vmax.f32 %v488, %v489
        %v492 = vmax.f32 %v491, %v490
        %v493 = vsub.f32 %v459, %v492
        %v494 = vsub.f32 %v460, %v492
        %v495 = vsub.f32 %v461, %v492
        %v496 = vmul.f32 %v493, 1.442695
        %v497 = vpow.pop %v496
        %v498 = vmul.f32 %v494, 1.442695
        %v499 = vpow.pop %v498
        %v500 = vmul.f32 %v495, 1.442695
        %v501 = vpow.pop %v500
        %v502 = vsel %vm487, %v497, 0.0
        %v503 = vsel %vm487, %v499, 0.0
        %v504 = vadd.f32 %v502, %v503
        %v505 = vsel %vm487, %v501, 0.0
        %v506 = vadd.f32 %v504, %v505
        %v507 = vmul.f32 %v484, %v459
        %v508 = vmul.f32 %v485, %v460
        %v509 = vmul.f32 %v486, %v461
        %v510 = vsel %vm487, %v507, 0.0
        %v511 = vsel %vm487, %v508, 0.0
        %v512 = vadd.f32 %v510, %v511
        %v513 = vsel %vm487, %v509, 0.0
        %v514 = vadd.f32 %v512, %v513
        %v515 = vmul.f32 %v480, %v468
        %v516 = vld [vmem:[%s417] sm:$0x1]
        %v517 = vlog2.pop %v506
        %v518 = vmul.f32 %v517, 0.6931472
        %v519 = vadd.f32 %v492, %v518
        %v520 = vsub.f32 %v519, %v514
        %v521 = vmul.f32 %v520, %v515
        %v522 = vsel %vm487, %v521, 0.0
        %v523 = vrot.slane %v522, 4
        %v524 = vadd.f32 %v522, %v523
        %v525 = vrot.slane %v524, 2
        %v526 = vadd.f32 %v524, %v525
        %v527 = vrot.slane %v526, 1
        %v528 = vadd.f32 %v526, %v527
        %v529 = vadd.f32 %v516, %v528
        %530 = vst [vmem:[%s417] sm:$0x1] %v529
        %v531 = vld [vmem:[%s423] sm:$0x1]
        %v532 = vsel %vm487, %v515, 0.0
        %v533 = vrot.slane %v532, 4
        %v534 = vadd.f32 %v532, %v533
        %v535 = vrot.slane %v534, 2
        %v536 = vadd.f32 %v534, %v535
        %v537 = vrot.slane %v536, 1
        %v538 = vadd.f32 %v536, %v537
        %v539 = vadd.f32 %v531, %v538
        %540 = vst [vmem:[%s423] sm:$0x1] %v539
        %v541 = vsub.f32 0.0, %v459
        %v542 = vsub.f32 0.0, %v460
        %v543 = vsub.f32 0.0, %v461
        %v544 = vmul.f32 %v541, 1.442695
        %v545 = vpow.pop %v544
        %v546 = vmul.f32 %v542, 1.442695
        %v547 = vpow.pop %v546
        %v548 = vmul.f32 %v543, 1.442695
        %v549 = vpow.pop %v548
        %v550 = vadd.f32 %v545, 1.0
        %v551 = vadd.f32 %v547, 1.0
        %v552 = vadd.f32 %v549, 1.0
        %v553 = vrcp.pop %v550
        %v554 = vrcp.pop %v551
        %v555 = vrcp.pop %v552
        %v556 = vmul.f32 %v484, %v468
        %v557 = vmul.f32 %v485, %v468
        %v558 = vmul.f32 %v486, %v468
        %v559 = vmul.f32 %v553, %v468
        %v560 = vmul.f32 %v554, %v468
        %v561 = vmul.f32 %v555, %v468
        %v562 = vld [vmem:[%s432] sm:$0x7]
        %v563 = vmul.f32 %v553, %v556
        %v564 = vmul.f32 %v554, %v557
        %v565 = vmul.f32 %v555, %v558
        %v566 = vsel %vm487, %v563, 0.0
        %v567 = vrot.slane %v566, 4
        %v568 = vadd.f32 %v566, %v567
        %v569 = vrot.slane %v568, 2
        %v570 = vadd.f32 %v568, %v569
        %v571 = vrot.slane %v570, 1
        %v572 = vadd.f32 %v570, %v571
        %v573 = vsel %vm487, %v564, 0.0
        %v574 = vrot.slane %v573, 4
        %v575 = vadd.f32 %v573, %v574
        %v576 = vrot.slane %v575, 2
        %v577 = vadd.f32 %v575, %v576
        %v578 = vrot.slane %v577, 1
        %v579 = vadd.f32 %v577, %v578
        %v580 = vsel %vm487, %v565, 0.0
        %v581 = vrot.slane %v580, 4
        %v582 = vadd.f32 %v580, %v581
        %v583 = vrot.slane %v582, 2
        %v584 = vadd.f32 %v582, %v583
        %v585 = vrot.slane %v584, 1
        %v586 = vadd.f32 %v584, %v585
        %vm590 = vcmask 1041409
        %v591 = vsel %vm590, %v579, %v572
        %vm592 = vcmask 1042434
        %v593 = vsel %vm592, %v586, %v591
        %v595 = vadd.f32 %v562, %v593
        %596 = vst [vmem:[%s432] sm:$0x7] %v595
        %v597 = vld [vmem:[%s439] sm:$0x7]
        %v598 = vsel %vm487, %v559, 0.0
        %v599 = vrot.slane %v598, 4
        %v600 = vadd.f32 %v598, %v599
        %v601 = vrot.slane %v600, 2
        %v602 = vadd.f32 %v600, %v601
        %v603 = vrot.slane %v602, 1
        %v604 = vadd.f32 %v602, %v603
        %v605 = vsel %vm487, %v560, 0.0
        %v606 = vrot.slane %v605, 4
        %v607 = vadd.f32 %v605, %v606
        %v608 = vrot.slane %v607, 2
        %v609 = vadd.f32 %v607, %v608
        %v610 = vrot.slane %v609, 1
        %v611 = vadd.f32 %v609, %v610
        %v612 = vsel %vm487, %v561, 0.0
        %v613 = vrot.slane %v612, 4
        %v614 = vadd.f32 %v612, %v613
        %v615 = vrot.slane %v614, 2
        %v616 = vadd.f32 %v614, %v615
        %v617 = vrot.slane %v616, 1
        %v618 = vadd.f32 %v616, %v617
        %v622 = vsel %vm590, %v611, %v604
        %v623 = vsel %vm592, %v618, %v622
        %v625 = vadd.f32 %v597, %v623
        %626 = vst [vmem:[%s439] sm:$0x7] %v625
        %v627 = vld [vmem:[%s446] sm:$0x7]
        %v628 = vsel %vm487, %v556, 0.0
        %v629 = vrot.slane %v628, 4
        %v630 = vadd.f32 %v628, %v629
        %v631 = vrot.slane %v630, 2
        %v632 = vadd.f32 %v630, %v631
        %v633 = vrot.slane %v632, 1
        %v634 = vadd.f32 %v632, %v633
        %v635 = vsel %vm487, %v557, 0.0
        %v636 = vrot.slane %v635, 4
        %v637 = vadd.f32 %v635, %v636
        %v638 = vrot.slane %v637, 2
        %v639 = vadd.f32 %v637, %v638
        %v640 = vrot.slane %v639, 1
        %v641 = vadd.f32 %v639, %v640
        %v642 = vsel %vm487, %v558, 0.0
        %v643 = vrot.slane %v642, 4
        %v644 = vadd.f32 %v642, %v643
        %v645 = vrot.slane %v644, 2
        %v646 = vadd.f32 %v644, %v645
        %v647 = vrot.slane %v646, 1
        %v648 = vadd.f32 %v646, %v647
        %v652 = vsel %vm590, %v641, %v634
        %v653 = vsel %vm592, %v648, %v652
        %v655 = vadd.f32 %v627, %v653
        %656 = vst [vmem:[%s446] sm:$0x7] %v655
        %p657 = scmp.lt.s32.totalorder %s37, 1
        %s658 = scalar_select %p657, %s37, 1
        %p659 = scmp.lt.s32.totalorder %s38, 0
        %s660 = scalar_select %p659, %s38, 0
        %s661 = sadd.s32 %s660, %s658
        %s662 = smul.addr %s661, 4
        %s663 = scalar_lea.vmem %s3, %s662
        %p664 = scmp.lt.s32.totalorder %s37, 1
        %s665 = scalar_select %p664, %s37, 1
        %p666 = scmp.lt.s32.totalorder %s38, 0
        %s667 = scalar_select %p666, %s38, 0
        %s668 = sadd.s32 %s667, %s665
        %s669 = smul.addr %s668, 4
        %s670 = scalar_lea.vmem %s4, %s669
        %p671 = scmp.lt.s32.totalorder %s37, 1
        %s672 = scalar_select %p671, %s37, 1
        %p673 = scmp.lt.s32.totalorder %s38, 0
        %s674 = scalar_select %p673, %s38, 0
        %s675 = sadd.s32 %s674, %s672
        %s676 = smul.addr %s675, 4
        %s677 = scalar_lea.vmem %s5, %s676
        %s678 = sand.u32 %s226, 1
        %s679 = scalar_lea.sflag [#allocation4], %s678
        %s680 = sand.u32 %s226, 1
        %s681 = scalar_lea.vmem [#allocation9], %s680
        %s682 = sand.u32 %s254, 1
        %s683 = scalar_lea.sflag [#allocation11], %s682
        %s684 = sand.u32 %s254, 1
        %s685 = scalar_lea.vmem [#allocation10], %s684
        // Predicated region
        $region49: #{tpu_custom_call.1} parent=31 // pred_check
          %p686 = pneg %p152
        $region50: #{tpu_custom_call.1} parent=31 // pred_check_branch
          %688 = sbr.rel (%p686) target = $region52
        $region51: #{tpu_custom_call.1} parent=31 // pred_region
          _
        $region52: #{tpu_custom_call.1} parent=31 // pred_fallthru
          _
        // Predicated region
        $region53: #{tpu_custom_call.1} parent=31 // pred_check
          %p689 = pneg %p180
        $region54: #{tpu_custom_call.1} parent=31 // pred_check_branch
          %691 = sbr.rel (%p689) target = $region56
        $region55: #{tpu_custom_call.1} parent=31 // pred_region
          _
        $region56: #{tpu_custom_call.1} parent=31 // pred_fallthru
          _
        // Predicated region
        $region57: #{tpu_custom_call.1} parent=31 // pred_check
          %p692 = pneg %p208
        $region58: #{tpu_custom_call.1} parent=31 // pred_check_branch
          %694 = sbr.rel (%p692) target = $region60
        $region59: #{tpu_custom_call.1} parent=31 // pred_region
          _
        $region60: #{tpu_custom_call.1} parent=31 // pred_fallthru
          _
        // Predicated region
        $region61: #{tpu_custom_call.1} parent=31 // pred_check
          %p695 = pneg %p236
        $region62: #{tpu_custom_call.1} parent=31 // pred_check_branch
          %697 = sbr.rel (%p695) target = $region64
        $region63: #{tpu_custom_call.1} parent=31 // pred_region
          %699 = vsyncadd %s679, 0
          %s700 = sadd.s32 %s38, %s37
          %s701 = scalar_lea.hbm %s6, %s700
          %s703 = sshll.u32 %s681, 4
          %s704 = int_to_ptr.vmem [resolvable:$true] %s703
          %s705 = sshll.u32 %s701, 4
          %s706 = int_to_ptr.hbm [resolvable:$true] %s705
          %708 = dma.vmem_to_hbm [thread:$0]  %s704, 16, %s706, %s679
        $region64: #{tpu_custom_call.1} parent=31 // pred_fallthru
          _
        // Predicated region
        $region65: #{tpu_custom_call.1} parent=31 // pred_check
          %p709 = pneg %p264
        $region66: #{tpu_custom_call.1} parent=31 // pred_check_branch
          %711 = sbr.rel (%p709) target = $region68
        $region67: #{tpu_custom_call.1} parent=31 // pred_region
          %713 = vsyncadd %s683, 0
          %s714 = sadd.s32 %s38, %s37
          %s715 = scalar_lea.hbm %s7, %s714
          %s717 = sshll.u32 %s685, 4
          %s718 = int_to_ptr.vmem [resolvable:$true] %s717
          %s719 = sshll.u32 %s715, 4
          %s720 = int_to_ptr.hbm [resolvable:$true] %s719
          %722 = dma.vmem_to_hbm [thread:$0]  %s718, 16, %s720, %s683
        $region68: #{tpu_custom_call.1} parent=31 // pred_fallthru
          _
      $region32: #{tpu_custom_call.1} parent=5 // pred_fallthru
        _
      %p723 = scmp.le.s32.totalorder 2, %s27
      // Predicated region
      $region69: #{tpu_custom_call.1} parent=5 // pred_check
        %p724 = pneg %p723
      $region70: #{tpu_custom_call.1} parent=5 // pred_check_branch
        %726 = sbr.rel (%p724) target = $region72
      $region71: #{tpu_custom_call.1} parent=5 // pred_region
        %s727 = ssub.s32 %s27, 2
        // Predicated region
        $region73: #{tpu_custom_call.1} parent=71 // pred_check
          %p728 = pneg %p158
        $region74: #{tpu_custom_call.1} parent=71 // pred_check_branch
          %730 = sbr.rel (%p728) target = $region76
        $region75: #{tpu_custom_call.1} parent=71 // pred_region
          %p731 = scmp.lt.s32.totalorder %s40, 1
          %s732 = scalar_select %p731, %s40, 1
          %p733 = scmp.lt.s32.totalorder %s41, 0
          %s734 = scalar_select %p733, %s41, 0
          %s735 = sadd.s32 %s734, %s732
          %s736 = smul.addr %s735, 4
          %s737 = scalar_lea.vmem %s3, %s736
        $region76: #{tpu_custom_call.1} parent=71 // pred_fallthru
          _
        // Predicated region
        $region77: #{tpu_custom_call.1} parent=71 // pred_check
          %p738 = pneg %p186
        $region78: #{tpu_custom_call.1} parent=71 // pred_check_branch
          %740 = sbr.rel (%p738) target = $region80
        $region79: #{tpu_custom_call.1} parent=71 // pred_region
          %p741 = scmp.lt.s32.totalorder %s40, 1
          %s742 = scalar_select %p741, %s40, 1
          %p743 = scmp.lt.s32.totalorder %s41, 0
          %s744 = scalar_select %p743, %s41, 0
          %s745 = sadd.s32 %s744, %s742
          %s746 = smul.addr %s745, 4
          %s747 = scalar_lea.vmem %s4, %s746
        $region80: #{tpu_custom_call.1} parent=71 // pred_fallthru
          _
        // Predicated region
        $region81: #{tpu_custom_call.1} parent=71 // pred_check
          %p748 = pneg %p214
        $region82: #{tpu_custom_call.1} parent=71 // pred_check_branch
          %750 = sbr.rel (%p748) target = $region84
        $region83: #{tpu_custom_call.1} parent=71 // pred_region
          %p751 = scmp.lt.s32.totalorder %s40, 1
          %s752 = scalar_select %p751, %s40, 1
          %p753 = scmp.lt.s32.totalorder %s41, 0
          %s754 = scalar_select %p753, %s41, 0
          %s755 = sadd.s32 %s754, %s752
          %s756 = smul.addr %s755, 4
          %s757 = scalar_lea.vmem %s5, %s756
        $region84: #{tpu_custom_call.1} parent=71 // pred_fallthru
          _
        // Predicated region
        $region85: #{tpu_custom_call.1} parent=71 // pred_check
          %p758 = pneg %p242
        $region86: #{tpu_custom_call.1} parent=71 // pred_check_branch
          %760 = sbr.rel (%p758) target = $region88
        $region87: #{tpu_custom_call.1} parent=71 // pred_region
          %s761 = sand.u32 %s227, 1
          %s762 = scalar_lea.sflag [#allocation4], %s761
          %s763 = sand.u32 %s227, 1
          %s764 = scalar_lea.vmem [#allocation9], %s763
          %766 = dma.done %s762, 16
        $region88: #{tpu_custom_call.1} parent=71 // pred_fallthru
          _
        // Predicated region
        $region89: #{tpu_custom_call.1} parent=71 // pred_check
          %p767 = pneg %p270
        $region90: #{tpu_custom_call.1} parent=71 // pred_check_branch
          %769 = sbr.rel (%p767) target = $region92
        $region91: #{tpu_custom_call.1} parent=71 // pred_region
          %s770 = sand.u32 %s255, 1
          %s771 = scalar_lea.sflag [#allocation11], %s770
          %s772 = sand.u32 %s255, 1
          %s773 = scalar_lea.vmem [#allocation10], %s772
          %775 = dma.done %s771, 16
        $region92: #{tpu_custom_call.1} parent=71 // pred_fallthru
          _
      $region72: #{tpu_custom_call.1} parent=5 // pred_fallthru
        _
    $region6: #{tpu_custom_call.1} parent=1 // loop_footer
      %s31 = sadd.s32 1, %s27
    $region7: #{tpu_custom_call.1} parent=1 // loop_footer_branch
      %26 = sbr.rel target = $region3
    $region8: #{tpu_custom_call.1} parent=1 // loop_exit
      _
    %776 = vsyncpa [#allocation3], 1
    %s777 = scalar_lea.sflag [#allocation3], 1
    %778 = vsyncpa %s777, 1
    %779 = vsyncpa [#allocation7], 1
    %s780 = scalar_lea.sflag [#allocation7], 1
    %781 = vsyncpa %s780, 1
    %782 = vsyncpa [#allocation4], 1
    %s783 = scalar_lea.sflag [#allocation4], 1
    %784 = vsyncpa %s783, 1
    %785 = vsyncpa [#allocation11], 1
    %s786 = scalar_lea.sflag [#allocation11], 1
    %787 = vsyncpa %s786, 1
    %788 = vsyncpa [#allocation5], 1
    %s789 = scalar_lea.sflag [#allocation5], 1
    %790 = vsyncpa %s789, 1

</llo_original>
